<compile_context>
chip_gen: v7x
topology: tpu7x:2x2x1
jax: 0.10.0
libtpu: 0.0.40
codegen_flags: <defaults>
</compile_context>

<pallas_src>
import jax
import jax.numpy as jnp
from jax.experimental import pallas as pl
from jax.experimental.pallas import tpu as pltpu


def _round_up(x, m):
    return ((x + m - 1) // m) * m


# ----------------------------------------------------------------------------
# Pallas kernel: 3-layer tanh MLP + single fused (edges|nodes) head
# ----------------------------------------------------------------------------
def _generator_kernel(x_ref,
                      w1_ref, b1_ref,
                      w2_ref, b2_ref,
                      w3_ref, b3_ref,
                      wh_ref, bh_ref,
                      out_ref):
    w_dtype = w1_ref.dtype
    # MLP trunk: Linear -> Tanh (dropout == identity at inference).
    # Bias-add + tanh in f32 (safe on v5e even with bf16 weight storage),
    # MXU inputs cast to the weight dtype, accumulation in f32.
    h = jnp.tanh(
        jnp.dot(x_ref[...], w1_ref[...], preferred_element_type=jnp.float32)
        + b1_ref[...])
    h = jnp.tanh(
        jnp.dot(h.astype(w_dtype), w2_ref[...],
                preferred_element_type=jnp.float32)
        + b2_ref[...])
    h = jnp.tanh(
        jnp.dot(h.astype(w_dtype), w3_ref[...],
                preferred_element_type=jnp.float32)
        + b3_ref[...])
    # Fused head: columns = [folded-symmetric edge head | node head | zero pad]
    out_ref[...] = (
        jnp.dot(h.astype(w_dtype), wh_ref[...],
                preferred_element_type=jnp.float32)
        + bh_ref[...]).astype(out_ref.dtype)


# ----------------------------------------------------------------------------
# Parameter prep: fold symmetrize+permute into the edge head, fuse heads,
# pad head columns to a multiple of 128 for lane-dense stores.
# ----------------------------------------------------------------------------
def prepare_params(params, *, vertexes, edges, nodes, dtype=jnp.float32):
    (w1, b1), (w2, b2), (w3, b3), (we, be), (wn, bn) = params
    D = we.shape[0]
    V, E, N = vertexes, edges, nodes

    # Fold: out[b, i, j, k] = 0.5 * (logit[b, k, i, j] + logit[b, k, j, i])
    we4 = we.reshape(D, E, V, V)
    we_sym = 0.5 * (we4 + jnp.swapaxes(we4, 2, 3))
    we_fold = jnp.transpose(we_sym, (0, 2, 3, 1)).reshape(D, V * V * E)
    be3 = be.reshape(E, V, V)
    be_sym = 0.5 * (be3 + jnp.swapaxes(be3, 1, 2))
    be_fold = jnp.transpose(be_sym, (1, 2, 0)).reshape(1, V * V * E)

    # Fuse edge + node heads; zero-pad columns to a multiple of 128.
    wh = jnp.concatenate([we_fold, wn], axis=1)
    bh = jnp.concatenate([be_fold, bn], axis=1)
    c = wh.shape[1]
    c_pad = _round_up(c, 128)
    if c_pad > c:
        wh = jnp.pad(wh, ((0, 0), (0, c_pad - c)))
        bh = jnp.pad(bh, ((0, 0), (0, c_pad - c)))

    # Weights in `dtype` (bf16 halves DMA/VMEM on v6e/v7x), biases kept f32.
    cast_w = lambda w: w.astype(dtype)
    cast_b = lambda b: b.astype(jnp.float32)
    return ((cast_w(w1), cast_b(b1)),
            (cast_w(w2), cast_b(b2)),
            (cast_w(w3), cast_b(b3)),
            (cast_w(wh), cast_b(bh)))


# ----------------------------------------------------------------------------
# Forward wrapper
# ----------------------------------------------------------------------------
def generator_forward(x, prepped, *, vertexes, edges, nodes, tb_max=512):
    (w1, b1), (w2, b2), (w3, b3), (wh, bh) = prepped
    B, z = x.shape
    V, E, N = vertexes, edges, nodes
    e_out = E * V * V
    n_out = V * N
    c_pad = wh.shape[1]
    h1, h2, h3 = w1.shape[1], w2.shape[1], w3.shape[1]

    # Batch tiling: TB multiple of 8, padded batch is a multiple of TB.
    TB = min(tb_max, _round_up(B, 8))
    B_pad = _round_up(B, TB)
    x_in = x.astype(w1.dtype)
    if B_pad > B:
        x_in = jnp.pad(x_in, ((0, B_pad - B), (0, 0)))
    grid = (B_pad // TB,)

    def _const_spec(shape):
        return pl.BlockSpec(shape, lambda i: (0,) * len(shape))

    params_flat = (w1, b1, w2, b2, w3, b3, wh, bh)
    in_specs = [pl.BlockSpec((TB, z), lambda i: (i, 0))]
    in_specs += [_const_spec(p.shape) for p in params_flat]
    out_specs = pl.BlockSpec((TB, c_pad), lambda i: (i, 0))

    # Advisory cost estimate so XLA schedules the call against the glue ops.
    flops = 2 * B_pad * (z * h1 + h1 * h2 + h2 * h3 + h3 * c_pad)
    transcendentals = B_pad * (h1 + h2 + h3)
    bytes_accessed = (x_in.size * x_in.dtype.itemsize
                      + sum(int(p.size) * p.dtype.itemsize for p in params_flat)
                      + B_pad * c_pad * 4)

    out = pl.pallas_call(
        _generator_kernel,
        out_shape=jax.ShapeDtypeStruct((B_pad, c_pad), jnp.float32),
        grid=grid,
        in_specs=in_specs,
        out_specs=out_specs,
        compiler_params=pltpu.CompilerParams(
            dimension_semantics=("parallel",)),
        cost_estimate=pl.CostEstimate(
            flops=int(flops),
            transcendentals=int(transcendentals),
            bytes_accessed=int(bytes_accessed)),
    )(x_in, *params_flat)

    out = out[:B]
    # Symmetrize/permute already folded into wh/bh: this is pure slicing.
    edges_logits = out[:, :e_out].reshape(B, V, V, E)
    nodes_logits = out[:, e_out:e_out + n_out].reshape(B, V, N)
    # TODO(synk): nn.Dropout is stochastic in train mode; modeled as identity (eval).
    return edges_logits, nodes_logits


# ----------------------------------------------------------------------------
# Deterministic parameter initialization (mirrors nn.Linear default init)
# ----------------------------------------------------------------------------
def init_linear(key, fan_in, fan_out):
    kw, kb = jax.random.split(key)
    bound = 1.0 / jnp.sqrt(jnp.float32(fan_in))
    # stored as (in, out) so the kernel does x @ W + b
    w = jax.random.uniform(kw, (fan_in, fan_out), jnp.float32, -bound, bound)
    b = jax.random.uniform(kb, (1, fan_out), jnp.float32, -bound, bound)
    return w, b


def init_generator_params(key, conv_dims, z_dim, vertexes, edges, nodes):
    keys = jax.random.split(key, len(conv_dims) + 2)
    params = []
    dims = [z_dim] + list(conv_dims)
    for i, (c0, c1) in enumerate(zip(dims[:-1], dims[1:])):
        params.append(init_linear(keys[i], c0, c1))
    params.append(init_linear(keys[-2], conv_dims[-1], edges * vertexes * vertexes))
    params.append(init_linear(keys[-1], conv_dims[-1], vertexes * nodes))
    return params


# ----------------------------------------------------------------------------
# Pure-JAX reference of the ORIGINAL PyTorch forward (for self-check)
# ----------------------------------------------------------------------------
def generator_ref(x, params, *, vertexes, edges, nodes):
    (w1, b1), (w2, b2), (w3, b3), (we, be), (wn, bn) = params
    h = jnp.tanh(x @ w1 + b1)
    h = jnp.tanh(h @ w2 + b2)
    h = jnp.tanh(h @ w3 + b3)
    e = (h @ we + be).reshape(-1, edges, vertexes, vertexes)
    e = (e + jnp.transpose(e, (0, 1, 3, 2))) / 2.0
    e = jnp.transpose(e, (0, 2, 3, 1))
    n = (h @ wn + bn).reshape(-1, vertexes, nodes)
    return e, n


if __name__ == "__main__":
    # Small shapes consistent with the module's constructor
    batch = 2
    z_dim = 8
    conv_dims = [32, 64, 128]
    vertexes, edges, nodes = 8, 4, 5

    key = jax.random.PRNGKey(0)
    kx, kp = jax.random.split(key)
    x = jax.random.normal(kx, (batch, z_dim), jnp.float32)
    params = init_generator_params(kp, conv_dims, z_dim, vertexes, edges, nodes)

    # f32 here for an exact check vs. the original semantics; pass
    # dtype=jnp.bfloat16 on v6e/v7x to halve DMA/VMEM (f32 accumulation kept).
    prepped = prepare_params(params, vertexes=vertexes, edges=edges,
                             nodes=nodes, dtype=jnp.float32)

    edges_logits, nodes_logits = generator_forward(
        x, prepped, vertexes=vertexes, edges=edges, nodes=nodes)
    jax.block_until_ready((edges_logits, nodes_logits))

    # sanity check against pure-JAX reference of the original module
    e_ref, n_ref = generator_ref(
        x, params, vertexes=vertexes, edges=edges, nodes=nodes)
    assert edges_logits.shape == (batch, vertexes, vertexes, edges)
    assert nodes_logits.shape == (batch, vertexes, nodes)
    assert jnp.allclose(edges_logits, e_ref, atol=1e-5, rtol=1e-5)
    assert jnp.allclose(nodes_logits, n_ref, atol=1e-5, rtol=1e-5)

    print("KERNEL_OK")
</pallas_src>

<mosaic_0001>
module attributes {stable_mosaic.version = 11 : i64} {
  func.func @_generator_kernel(%arg0: i32, %arg1: memref<8x8xf32, #tpu.memory_space<vmem>>, %arg2: memref<8x32xf32, #tpu.memory_space<vmem>>, %arg3: memref<1x32xf32, #tpu.memory_space<vmem>>, %arg4: memref<32x64xf32, #tpu.memory_space<vmem>>, %arg5: memref<1x64xf32, #tpu.memory_space<vmem>>, %arg6: memref<64x128xf32, #tpu.memory_space<vmem>>, %arg7: memref<1x128xf32, #tpu.memory_space<vmem>>, %arg8: memref<128x384xf32, #tpu.memory_space<vmem>>, %arg9: memref<1x384xf32, #tpu.memory_space<vmem>>, %arg10: memref<8x384xf32, #tpu.memory_space<vmem>>) attributes {dimension_semantics = [#tpu.dimension_semantics<parallel>], iteration_bounds = array<i64: 1>, scalar_prefetch = 0 : i64, scratch_operands = 0 : i64, tpu.core_type = #tpu.core_type<tc>, window_params = [{transform_indices = @transform_0, window_bounds = array<i64: 8, 8>}, {pipeline_mode = #tpu.pipeline_mode<synchronous>, transform_indices = @transform_1, window_bounds = array<i64: 8, 32>}, {pipeline_mode = #tpu.pipeline_mode<synchronous>, transform_indices = @transform_2, window_bounds = array<i64: 1, 32>}, {pipeline_mode = #tpu.pipeline_mode<synchronous>, transform_indices = @transform_3, window_bounds = array<i64: 32, 64>}, {pipeline_mode = #tpu.pipeline_mode<synchronous>, transform_indices = @transform_4, window_bounds = array<i64: 1, 64>}, {pipeline_mode = #tpu.pipeline_mode<synchronous>, transform_indices = @transform_5, window_bounds = array<i64: 64, 128>}, {pipeline_mode = #tpu.pipeline_mode<synchronous>, transform_indices = @transform_6, window_bounds = array<i64: 1, 128>}, {pipeline_mode = #tpu.pipeline_mode<synchronous>, transform_indices = @transform_7, window_bounds = array<i64: 128, 384>}, {pipeline_mode = #tpu.pipeline_mode<synchronous>, transform_indices = @transform_8, window_bounds = array<i64: 1, 384>}, {transform_indices = @transform_9, window_bounds = array<i64: 8, 384>}]} {
    %c0 = arith.constant 0 : index
    %c0_0 = arith.constant 0 : index
    %0 = vector.load %arg1[%c0, %c0_0] : memref<8x8xf32, #tpu.memory_space<vmem>>, vector<8x8xf32>
    %c0_1 = arith.constant 0 : index
    %c0_2 = arith.constant 0 : index
    %1 = vector.load %arg2[%c0_1, %c0_2] : memref<8x32xf32, #tpu.memory_space<vmem>>, vector<8x32xf32>
    %cst = arith.constant dense<0.000000e+00> : vector<8x32xf32>
    %2 = tpu.matmul %0, %1, %cst {dimension_numbers = #tpu.dot_dimension_numbers<[1], [0], [0], [1], [0, 0, 1, 1], [], []>} : vector<8x8xf32>, vector<8x32xf32>, vector<8x32xf32> -> vector<8x32xf32>
    %c0_3 = arith.constant 0 : index
    %c0_4 = arith.constant 0 : index
    %3 = vector.load %arg3[%c0_3, %c0_4] : memref<1x32xf32, #tpu.memory_space<vmem>>, vector<1x32xf32>
    %4 = vector.broadcast %3 : vector<1x32xf32> to vector<8x32xf32>
    %5 = arith.addf %2, %4 : vector<8x32xf32>
    %6 = math.tanh %5 : vector<8x32xf32>
    %c0_5 = arith.constant 0 : index
    %c0_6 = arith.constant 0 : index
    %7 = vector.load %arg4[%c0_5, %c0_6] : memref<32x64xf32, #tpu.memory_space<vmem>>, vector<32x64xf32>
    %cst_7 = arith.constant dense<0.000000e+00> : vector<8x64xf32>
    %8 = tpu.matmul %6, %7, %cst_7 {dimension_numbers = #tpu.dot_dimension_numbers<[1], [0], [0], [1], [0, 0, 1, 1], [], []>} : vector<8x32xf32>, vector<32x64xf32>, vector<8x64xf32> -> vector<8x64xf32>
    %c0_8 = arith.constant 0 : index
    %c0_9 = arith.constant 0 : index
    %9 = vector.load %arg5[%c0_8, %c0_9] : memref<1x64xf32, #tpu.memory_space<vmem>>, vector<1x64xf32>
    %10 = vector.broadcast %9 : vector<1x64xf32> to vector<8x64xf32>
    %11 = arith.addf %8, %10 : vector<8x64xf32>
    %12 = math.tanh %11 : vector<8x64xf32>
    %c0_10 = arith.constant 0 : index
    %c0_11 = arith.constant 0 : index
    %13 = vector.load %arg6[%c0_10, %c0_11] : memref<64x128xf32, #tpu.memory_space<vmem>>, vector<64x128xf32>
    %cst_12 = arith.constant dense<0.000000e+00> : vector<8x128xf32>
    %14 = tpu.matmul %12, %13, %cst_12 {dimension_numbers = #tpu.dot_dimension_numbers<[1], [0], [0], [1], [0, 0, 1, 1], [], []>} : vector<8x64xf32>, vector<64x128xf32>, vector<8x128xf32> -> vector<8x128xf32>
    %c0_13 = arith.constant 0 : index
    %c0_14 = arith.constant 0 : index
    %15 = vector.load %arg7[%c0_13, %c0_14] : memref<1x128xf32, #tpu.memory_space<vmem>>, vector<1x128xf32>
    %16 = vector.broadcast %15 : vector<1x128xf32> to vector<8x128xf32>
    %17 = arith.addf %14, %16 : vector<8x128xf32>
    %18 = math.tanh %17 : vector<8x128xf32>
    %c0_15 = arith.constant 0 : index
    %c0_16 = arith.constant 0 : index
    %19 = vector.load %arg8[%c0_15, %c0_16] : memref<128x384xf32, #tpu.memory_space<vmem>>, vector<128x384xf32>
    %cst_17 = arith.constant dense<0.000000e+00> : vector<8x384xf32>
    %20 = tpu.matmul %18, %19, %cst_17 {dimension_numbers = #tpu.dot_dimension_numbers<[1], [0], [0], [1], [0, 0, 1, 1], [], []>} : vector<8x128xf32>, vector<128x384xf32>, vector<8x384xf32> -> vector<8x384xf32>
    %c0_18 = arith.constant 0 : index
    %c0_19 = arith.constant 0 : index
    %21 = vector.load %arg9[%c0_18, %c0_19] : memref<1x384xf32, #tpu.memory_space<vmem>>, vector<1x384xf32>
    %22 = vector.broadcast %21 : vector<1x384xf32> to vector<8x384xf32>
    %23 = arith.addf %20, %22 : vector<8x384xf32>
    %c0_20 = arith.constant 0 : index
    %c0_21 = arith.constant 0 : index
    %24 = vector.load %arg10[%c0_20, %c0_21] : memref<8x384xf32, #tpu.memory_space<vmem>>, vector<8x384xf32>
    tpu.vector_store %arg10[%c0_20, %c0_21], %23 {strides = array<i32>} : memref<8x384xf32, #tpu.memory_space<vmem>>, vector<8x384xf32>,
    return
  }
  func.func @transform_0(%arg0: i32) -> (i32, i32) {
    %c0_i32 = arith.constant 0 : i32
    %c0_i32_0 = arith.constant 0 : i32
    return %arg0, %c0_i32 : i32, i32
  }
  func.func @transform_1(%arg0: i32) -> (i32, i32) {
    %c0_i32 = arith.constant 0 : i32
    %c0_i32_0 = arith.constant 0 : i32
    %c0_i32_1 = arith.constant 0 : i32
    return %c0_i32, %c0_i32_0 : i32, i32
  }
  func.func @transform_2(%arg0: i32) -> (i32, i32) {
    %c0_i32 = arith.constant 0 : i32
    %c0_i32_0 = arith.constant 0 : i32
    %c0_i32_1 = arith.constant 0 : i32
    return %c0_i32, %c0_i32_0 : i32, i32
  }
  func.func @transform_3(%arg0: i32) -> (i32, i32) {
    %c0_i32 = arith.constant 0 : i32
    %c0_i32_0 = arith.constant 0 : i32
    %c0_i32_1 = arith.constant 0 : i32
    return %c0_i32, %c0_i32_0 : i32, i32
  }
  func.func @transform_4(%arg0: i32) -> (i32, i32) {
    %c0_i32 = arith.constant 0 : i32
    %c0_i32_0 = arith.constant 0 : i32
    %c0_i32_1 = arith.constant 0 : i32
    return %c0_i32, %c0_i32_0 : i32, i32
  }
  func.func @transform_5(%arg0: i32) -> (i32, i32) {
    %c0_i32 = arith.constant 0 : i32
    %c0_i32_0 = arith.constant 0 : i32
    %c0_i32_1 = arith.constant 0 : i32
    return %c0_i32, %c0_i32_0 : i32, i32
  }
  func.func @transform_6(%arg0: i32) -> (i32, i32) {
    %c0_i32 = arith.constant 0 : i32
    %c0_i32_0 = arith.constant 0 : i32
    %c0_i32_1 = arith.constant 0 : i32
    return %c0_i32, %c0_i32_0 : i32, i32
  }
  func.func @transform_7(%arg0: i32) -> (i32, i32) {
    %c0_i32 = arith.constant 0 : i32
    %c0_i32_0 = arith.constant 0 : i32
    %c0_i32_1 = arith.constant 0 : i32
    return %c0_i32, %c0_i32_0 : i32, i32
  }
  func.func @transform_8(%arg0: i32) -> (i32, i32) {
    %c0_i32 = arith.constant 0 : i32
    %c0_i32_0 = arith.constant 0 : i32
    %c0_i32_1 = arith.constant 0 : i32
    return %c0_i32, %c0_i32_0 : i32, i32
  }
  func.func @transform_9(%arg0: i32) -> (i32, i32) {
    %c0_i32 = arith.constant 0 : i32
    %c0_i32_0 = arith.constant 0 : i32
    return %arg0, %c0_i32 : i32, i32
  }
}

</mosaic_0001>

<llo_original>
// kernel: tpu_custom_call.1
$region0: #{tpu_custom_call.1}
  #allocation0 [shape = 'u32[]', space=smem, size = 0x4, offset = 0x4, fixed_abs, tag = 'smem constant byte address 0x4 - core index']
  #allocation1 [shape = 'u32[144,128]{1,0:T(1,128)}', space=vmem, size = 0x12000, scoped, tag = 'internal scratch']
  %s0 = inlined_call_operand.hbm [shape: f32[8,8], index: 0, kind: input, shape index: {}]
  %s1 = inlined_call_operand.hbm [shape: f32[8,32], index: 1, kind: input, shape index: {}]
  %s2 = inlined_call_operand.vmem [shape: f32[1,32], index: 2, kind: input, shape index: {}]
  %s3 = inlined_call_operand.hbm [shape: f32[32,64], index: 3, kind: input, shape index: {}]
  %s4 = inlined_call_operand.vmem [shape: f32[1,64], index: 4, kind: input, shape index: {}]
  %s5 = inlined_call_operand.hbm [shape: f32[64,128], index: 5, kind: input, shape index: {}]
  %s6 = inlined_call_operand.vmem [shape: f32[1,128], index: 6, kind: input, shape index: {}]
  %s7 = inlined_call_operand.hbm [shape: f32[128,384], index: 7, kind: input, shape index: {}]
  %s8 = inlined_call_operand.vmem [shape: f32[1,384], index: 8, kind: input, shape index: {}]
  %s9 = inlined_call_operand.hbm [shape: f32[8,384], index: 9, kind: output, shape index: {}]
  %s10 = sld [smem:[#allocation0]]
  $region66: #{tpu_custom_call.1} parent=0
    _
  %s12 = ssub.s32 1, %s10
  %s13 = scalar_select 0, %s12, %s10
  $region1: #{tpu_custom_call.1} parent=0
    #allocation2 [shape = 'u8[4096]{0}', space=vmem, size = 0x1000, scoped, tag = 'input window, operand 0, single buffered']
    #allocation3 [shape = 's32[1]{0}', space=sflag, size = 0x4, scoped, tag = 'scoped memory for tpu_custom_call.1']
    #allocation4 [shape = 's32[1]{0}', space=sflag, size = 0x4, scoped, tag = 'scoped memory for tpu_custom_call.1']
    #allocation5 [shape = 'u8[4096]{0}', space=vmem, size = 0x1000, scoped, tag = 'input window, operand 1, single buffered']
    #allocation6 [shape = 's32[1]{0}', space=sflag, size = 0x4, scoped, tag = 'scoped memory for tpu_custom_call.1']
    #allocation7 [shape = 'u8[16384]{0}', space=vmem, size = 0x4000, scoped, tag = 'input window, operand 3, single buffered']
    #allocation8 [shape = 'u8[32768]{0}', space=vmem, size = 0x8000, scoped, tag = 'input window, operand 5, single buffered']
    #allocation9 [shape = 's32[1]{0}', space=sflag, size = 0x4, scoped, tag = 'scoped memory for tpu_custom_call.1']
    #allocation10 [shape = 'u8[196608]{0}', space=vmem, size = 0x30000, scoped, tag = 'input window, operand 7, single buffered']
    #allocation11 [shape = 'u8[12288]{0}', space=vmem, size = 0x3000, scoped, tag = 'output window, operand 0, single buffered']
    %14 = vsyncpa [#allocation3], 0
    %15 = vsyncpa [#allocation6], 0
    %16 = vsyncpa [#allocation9], 0
    %17 = vsyncpa [#allocation4], 0
    // Predicated region
    $region2: #{tpu_custom_call.1} parent=1 // pred_check
      _
    $region3: #{tpu_custom_call.1} parent=1 // pred_check_branch
      %19 = sbr.rel (0) target = $region5
    $region4: #{tpu_custom_call.1} parent=1 // pred_region
      %s21 = ssub.s32 128, 128
      %22 = vsyncadd [#allocation3], %s21
      %s24 = sshll.u32 [#allocation2], 4
      %s25 = int_to_ptr.vmem [resolvable:$true] %s24
      %27 = dma.hbm_to_vmem [thread:$0]  %s0, 128, %s25, [#allocation3]
    $region5: #{tpu_custom_call.1} parent=1 // pred_fallthru
      _
    // Predicated region
    $region6: #{tpu_custom_call.1} parent=1 // pred_check
      _
    $region7: #{tpu_custom_call.1} parent=1 // pred_check_branch
      %29 = sbr.rel (0) target = $region9
    $region8: #{tpu_custom_call.1} parent=1 // pred_region
      %s31 = ssub.s32 128, 128
      %32 = vsyncadd [#allocation6], %s31
      %s34 = sshll.u32 [#allocation5], 4
      %s35 = int_to_ptr.vmem [resolvable:$true] %s34
      %37 = dma.hbm_to_vmem [thread:$0]  %s1, 128, %s35, [#allocation6]
    $region9: #{tpu_custom_call.1} parent=1 // pred_fallthru
      _
    // Predicated region
    $region10: #{tpu_custom_call.1} parent=1 // pred_check
      _
    $region11: #{tpu_custom_call.1} parent=1 // pred_check_branch
      %39 = sbr.rel (0) target = $region13
    $region12: #{tpu_custom_call.1} parent=1 // pred_region
      _
    $region13: #{tpu_custom_call.1} parent=1 // pred_fallthru
      _
    // Predicated region
    $region14: #{tpu_custom_call.1} parent=1 // pred_check
      _
    $region15: #{tpu_custom_call.1} parent=1 // pred_check_branch
      %41 = sbr.rel (0) target = $region17
    $region16: #{tpu_custom_call.1} parent=1 // pred_region
      %s43 = ssub.s32 512, 512
      %44 = vsyncadd [#allocation6], %s43
      %s45 = sshll.u32 [#allocation7], 4
      %s46 = int_to_ptr.vmem [resolvable:$true] %s45
      %51 = dma.hbm_to_vmem [thread:$0]  %s3, 512, %s46, [#allocation6], 128, 128, 8
    $region17: #{tpu_custom_call.1} parent=1 // pred_fallthru
      _
    // Predicated region
    $region18: #{tpu_custom_call.1} parent=1 // pred_check
      _
    $region19: #{tpu_custom_call.1} parent=1 // pred_check_branch
      %53 = sbr.rel (0) target = $region21
    $region20: #{tpu_custom_call.1} parent=1 // pred_region
      _
    $region21: #{tpu_custom_call.1} parent=1 // pred_fallthru
      _
    // Predicated region
    $region22: #{tpu_custom_call.1} parent=1 // pred_check
      _
    $region23: #{tpu_custom_call.1} parent=1 // pred_check_branch
      %55 = sbr.rel (0) target = $region25
    $region24: #{tpu_custom_call.1} parent=1 // pred_region
      %s57 = ssub.s32 1024, 1024
      %58 = vsyncadd [#allocation9], %s57
      %s59 = sshll.u32 [#allocation8], 4
      %s60 = int_to_ptr.vmem [resolvable:$true] %s59
      %65 = dma.hbm_to_vmem [thread:$0]  %s5, 1024, %s60, [#allocation9], 128, 128, 8
    $region25: #{tpu_custom_call.1} parent=1 // pred_fallthru
      _
    // Predicated region
    $region26: #{tpu_custom_call.1} parent=1 // pred_check
      _
    $region27: #{tpu_custom_call.1} parent=1 // pred_check_branch
      %67 = sbr.rel (0) target = $region29
    $region28: #{tpu_custom_call.1} parent=1 // pred_region
      _
    $region29: #{tpu_custom_call.1} parent=1 // pred_fallthru
      _
    // Predicated region
    $region30: #{tpu_custom_call.1} parent=1 // pred_check
      _
    $region31: #{tpu_custom_call.1} parent=1 // pred_check_branch
      %69 = sbr.rel (0) target = $region33
    $region32: #{tpu_custom_call.1} parent=1 // pred_region
      %s71 = ssub.s32 6144, 6144
      %72 = vsyncadd [#allocation9], %s71
      %s73 = sshll.u32 [#allocation10], 4
      %s74 = int_to_ptr.vmem [resolvable:$true] %s73
      %79 = dma.hbm_to_vmem [thread:$0]  %s7, 6144, %s74, [#allocation9], 384, 384, 24
    $region33: #{tpu_custom_call.1} parent=1 // pred_fallthru
      _
    // Predicated region
    $region34: #{tpu_custom_call.1} parent=1 // pred_check
      _
    $region35: #{tpu_custom_call.1} parent=1 // pred_check_branch
      %81 = sbr.rel (0) target = $region37
    $region36: #{tpu_custom_call.1} parent=1 // pred_region
      _
    $region37: #{tpu_custom_call.1} parent=1 // pred_fallthru
      _
    // Predicated region
    $region38: #{tpu_custom_call.1} parent=1 // pred_check
      _
    $region39: #{tpu_custom_call.1} parent=1 // pred_check_branch
      %83 = sbr.rel (0) target = $region41
    $region40: #{tpu_custom_call.1} parent=1 // pred_region
      %84 = dma.done [#allocation3], 128
    $region41: #{tpu_custom_call.1} parent=1 // pred_fallthru
      _
    // Predicated region
    $region42: #{tpu_custom_call.1} parent=1 // pred_check
      _
    $region43: #{tpu_custom_call.1} parent=1 // pred_check_branch
      %86 = sbr.rel (0) target = $region45
    $region44: #{tpu_custom_call.1} parent=1 // pred_region
      %87 = dma.done [#allocation6], 128
    $region45: #{tpu_custom_call.1} parent=1 // pred_fallthru
      _
    // Predicated region
    $region46: #{tpu_custom_call.1} parent=1 // pred_check
      _
    $region47: #{tpu_custom_call.1} parent=1 // pred_check_branch
      %89 = sbr.rel (0) target = $region49
    $region48: #{tpu_custom_call.1} parent=1 // pred_region
      %90 = dma.done [#allocation6], 512
    $region49: #{tpu_custom_call.1} parent=1 // pred_fallthru
      _
    // Predicated region
    $region50: #{tpu_custom_call.1} parent=1 // pred_check
      _
    $region51: #{tpu_custom_call.1} parent=1 // pred_check_branch
      %92 = sbr.rel (0) target = $region53
    $region52: #{tpu_custom_call.1} parent=1 // pred_region
      %93 = dma.done [#allocation9], 1024
    $region53: #{tpu_custom_call.1} parent=1 // pred_fallthru
      _
    // Predicated region
    $region54: #{tpu_custom_call.1} parent=1 // pred_check
      _
    $region55: #{tpu_custom_call.1} parent=1 // pred_check_branch
      %95 = sbr.rel (0) target = $region57
    $region56: #{tpu_custom_call.1} parent=1 // pred_region
      %96 = dma.done [#allocation9], 6144
    $region57: #{tpu_custom_call.1} parent=1 // pred_fallthru
      _
    %v97 = vld [vmem:[#allocation2] sm:$0xff]
    %v98 = vld [vmem:[#allocation5] sm:$0xff]
    %v99 = vld [vmem:[%s2] sm:$0x1]
    %v101 = vlaneseq
    %v102 = vshrl.u32 %v101, 7
    %v103 = vsub.s32 0, %v102
    %v104 = vrot.slane %v99, %v103
    %vm106 = vcmask 64512
    %v108 = vsel %vm106, %v97, 0
    %110 = vmatprep.subr.mxu0 0.0
    %111 = vmatpush1.msra.mxu0 %v98
    %112 = vmatprep.subr.mxu0 0.0
    %113 = vmatpush1.msra.mxu0 0.0
    %114 = vmatprep.subr.mxu0 0.0
    %115 = vmatpush1.msra.mxu0 0.0
    %116 = vmatprep.subr.mxu0 0.0
    %117 = vmatpush1.msra.mxu0 0.0
    %118 = vmatprep.subr.mxu0 0.0
    %119 = vmatpush1.msra.mxu0 0.0
    %120 = vmatprep.subr.mxu0 0.0
    %121 = vmatpush1.msra.mxu0 0.0
    %122 = vmatprep.subr.mxu0 0.0
    %123 = vmatpush1.msra.mxu0 0.0
    %124 = vmatprep.subr.mxu0 0.0
    %125 = vmatpush1.msra.mxu0 0.0
    %126 = vmatprep.subr.mxu0 0.0
    %127 = vmatpush1.msra.mxu0 0.0
    %128 = vmatprep.subr.mxu0 0.0
    %129 = vmatpush1.msra.mxu0 0.0
    %130 = vmatprep.subr.mxu0 0.0
    %131 = vmatpush1.msra.mxu0 0.0
    %132 = vmatprep.subr.mxu0 0.0
    %133 = vmatpush1.msra.mxu0 0.0
    %134 = vmatprep.subr.mxu0 0.0
    %135 = vmatpush1.msra.mxu0 0.0
    %136 = vmatprep.subr.mxu0 0.0
    %137 = vmatpush1.msra.mxu0 0.0
    %138 = vmatprep.subr.mxu0 0.0
    %139 = vmatpush1.msra.mxu0 0.0
    %140 = vmatprep.subr.mxu0 0.0
    %141 = vmatpush1.msra.mxu0 0.0
    %142 = vmatprep.subr.mxu0 0.0
    %143 = vmatpush1.msra.mxu0 0.0
    %144 = vmatprep.subr.mxu0 0.0
    %145 = vmatpush1.msra.mxu0 0.0
    %146 = vmatprep.subr.mxu0 0.0
    %147 = vmatpush1.msra.mxu0 0.0
    %148 = vmatprep.subr.mxu0 0.0
    %149 = vmatpush1.msra.mxu0 0.0
    %150 = vmatprep.subr.mxu0 0.0
    %151 = vmatpush1.msra.mxu0 0.0
    %152 = vmatprep.subr.mxu0 0.0
    %153 = vmatpush1.msra.mxu0 0.0
    %154 = vmatprep.subr.mxu0 0.0
    %155 = vmatpush1.msra.mxu0 0.0
    %156 = vmatprep.subr.mxu0 0.0
    %157 = vmatpush1.msra.mxu0 0.0
    %158 = vmatprep.subr.mxu0 0.0
    %159 = vmatpush1.msra.mxu0 0.0
    %160 = vmatprep.subr.mxu0 0.0
    %161 = vmatpush1.msra.mxu0 0.0
    %162 = vmatprep.subr.mxu0 0.0
    %163 = vmatpush1.msra.mxu0 0.0
    %164 = vmatprep.subr.mxu0 0.0
    %165 = vmatpush1.msra.mxu0 0.0
    %166 = vmatprep.subr.mxu0 0.0
    %167 = vmatpush1.msra.mxu0 0.0
    %168 = vmatprep.subr.mxu0 0.0
    %169 = vmatpush1.msra.mxu0 0.0
    %170 = vmatprep.subr.mxu0 0.0
    %171 = vmatpush1.msra.mxu0 0.0
    %172 = vmatprep.subr.mxu0 0.0
    %173 = vmatpush1.msra.mxu0 0.0
    %174 = vmatprep.mubr.f32.mxu0 0.0
    %175 = vmatmul.mubr.f32.gmra.mrb[0].mxu0 %v108
    %v176 = vpop.f32.mrb[0].mxu0
    %v177 = vadd.f32 %v104, %v176
    %v178 = vpop.f32.mrb[0].mxu0
    %179 = vdwg.mxu0
    %v180 = vtanh.pop %v177
    %v181 = vld [vmem:[#allocation7] sm:$0xff]
    %v182 = vld [vmem:[#allocation7 + $0x8] sm:$0xff]
    %v183 = vld [vmem:[#allocation7 + $0x10] sm:$0xff]
    %v184 = vld [vmem:[#allocation7 + $0x18] sm:$0xff]
    %v185 = vld [vmem:[%s4] sm:$0x1]
    %v187 = vlaneseq
    %v188 = vshrl.u32 %v187, 7
    %v189 = vsub.s32 0, %v188
    %v190 = vrot.slane %v185, %v189
    %vm192 = vcmask 261120
    %v194 = vsel %vm192, %v180, 0
    %196 = vmatprep.subr.mxu0 0.0
    %197 = vmatpush1.msra.mxu0 %v181
    %198 = vmatprep.subr.mxu0 0.0
    %199 = vmatpush1.msra.mxu0 %v182
    %200 = vmatprep.subr.mxu0 0.0
    %201 = vmatpush1.msra.mxu0 %v183
    %202 = vmatprep.subr.mxu0 0.0
    %203 = vmatpush1.msra.mxu0 %v184
    %204 = vmatprep.subr.mxu0 0.0
    %205 = vmatpush1.msra.mxu0 0.0
    %206 = vmatprep.subr.mxu0 0.0
    %207 = vmatpush1.msra.mxu0 0.0
    %208 = vmatprep.subr.mxu0 0.0
    %209 = vmatpush1.msra.mxu0 0.0
    %210 = vmatprep.subr.mxu0 0.0
    %211 = vmatpush1.msra.mxu0 0.0
    %212 = vmatprep.subr.mxu0 0.0
    %213 = vmatpush1.msra.mxu0 0.0
    %214 = vmatprep.subr.mxu0 0.0
    %215 = vmatpush1.msra.mxu0 0.0
    %216 = vmatprep.subr.mxu0 0.0
    %217 = vmatpush1.msra.mxu0 0.0
    %218 = vmatprep.subr.mxu0 0.0
    %219 = vmatpush1.msra.mxu0 0.0
    %220 = vmatprep.subr.mxu0 0.0
    %221 = vmatpush1.msra.mxu0 0.0
    %222 = vmatprep.subr.mxu0 0.0
    %223 = vmatpush1.msra.mxu0 0.0
    %224 = vmatprep.subr.mxu0 0.0
    %225 = vmatpush1.msra.mxu0 0.0
    %226 = vmatprep.subr.mxu0 0.0
    %227 = vmatpush1.msra.mxu0 0.0
    %228 = vmatprep.subr.mxu0 0.0
    %229 = vmatpush1.msra.mxu0 0.0
    %230 = vmatprep.subr.mxu0 0.0
    %231 = vmatpush1.msra.mxu0 0.0
    %232 = vmatprep.subr.mxu0 0.0
    %233 = vmatpush1.msra.mxu0 0.0
    %234 = vmatprep.subr.mxu0 0.0
    %235 = vmatpush1.msra.mxu0 0.0
    %236 = vmatprep.subr.mxu0 0.0
    %237 = vmatpush1.msra.mxu0 0.0
    %238 = vmatprep.subr.mxu0 0.0
    %239 = vmatpush1.msra.mxu0 0.0
    %240 = vmatprep.subr.mxu0 0.0
    %241 = vmatpush1.msra.mxu0 0.0
    %242 = vmatprep.subr.mxu0 0.0
    %243 = vmatpush1.msra.mxu0 0.0
    %244 = vmatprep.subr.mxu0 0.0
    %245 = vmatpush1.msra.mxu0 0.0
    %246 = vmatprep.subr.mxu0 0.0
    %247 = vmatpush1.msra.mxu0 0.0
    %248 = vmatprep.subr.mxu0 0.0
    %249 = vmatpush1.msra.mxu0 0.0
    %250 = vmatprep.subr.mxu0 0.0
    %251 = vmatpush1.msra.mxu0 0.0
    %252 = vmatprep.subr.mxu0 0.0
    %253 = vmatpush1.msra.mxu0 0.0
    %254 = vmatprep.subr.mxu0 0.0
    %255 = vmatpush1.msra.mxu0 0.0
    %256 = vmatprep.subr.mxu0 0.0
    %257 = vmatpush1.msra.mxu0 0.0
    %258 = vmatprep.subr.mxu0 0.0
    %259 = vmatpush1.msra.mxu0 0.0
    %260 = vmatprep.mubr.f32.mxu0 0.0
    %261 = vmatmul.mubr.f32.gmra.mrb[0].mxu0 %v194
    %v262 = vpop.f32.mrb[0].mxu0
    %v263 = vadd.f32 %v190, %v262
    %v264 = vpop.f32.mrb[0].mxu0
    %265 = vdwg.mxu0
    %v266 = vtanh.pop %v263
    %v267 = vld [vmem:[#allocation8] sm:$0xff]
    %v268 = vld [vmem:[#allocation8 + $0x8] sm:$0xff]
    %v269 = vld [vmem:[#allocation8 + $0x10] sm:$0xff]
    %v270 = vld [vmem:[#allocation8 + $0x18] sm:$0xff]
    %v271 = vld [vmem:[#allocation8 + $0x20] sm:$0xff]
    %v272 = vld [vmem:[#allocation8 + $0x28] sm:$0xff]
    %v273 = vld [vmem:[#allocation8 + $0x30] sm:$0xff]
    %v274 = vld [vmem:[#allocation8 + $0x38] sm:$0xff]
    %v275 = vld [vmem:[%s6] sm:$0x1]
    %v277 = vlaneseq
    %v278 = vshrl.u32 %v277, 7
    %v279 = vsub.s32 0, %v278
    %v280 = vrot.slane %v275, %v279
    %vm282 = vcmask 523264
    %v284 = vsel %vm282, %v266, 0
    %286 = vmatprep.subr.mxu0 0.0
    %287 = vmatpush1.msra.mxu0 %v267
    %288 = vmatprep.subr.mxu0 0.0
    %289 = vmatpush1.msra.mxu0 %v268
    %290 = vmatprep.subr.mxu0 0.0
    %291 = vmatpush1.msra.mxu0 %v269
    %292 = vmatprep.subr.mxu0 0.0
    %293 = vmatpush1.msra.mxu0 %v270
    %294 = vmatprep.subr.mxu0 0.0
    %295 = vmatpush1.msra.mxu0 %v271
    %296 = vmatprep.subr.mxu0 0.0
    %297 = vmatpush1.msra.mxu0 %v272
    %298 = vmatprep.subr.mxu0 0.0
    %299 = vmatpush1.msra.mxu0 %v273
    %300 = vmatprep.subr.mxu0 0.0
    %301 = vmatpush1.msra.mxu0 %v274
    %302 = vmatprep.subr.mxu0 0.0
    %303 = vmatpush1.msra.mxu0 0.0
    %304 = vmatprep.subr.mxu0 0.0
    %305 = vmatpush1.msra.mxu0 0.0
    %306 = vmatprep.subr.mxu0 0.0
    %307 = vmatpush1.msra.mxu0 0.0
    %308 = vmatprep.subr.mxu0 0.0
    %309 = vmatpush1.msra.mxu0 0.0
    %310 = vmatprep.subr.mxu0 0.0
    %311 = vmatpush1.msra.mxu0 0.0
    %312 = vmatprep.subr.mxu0 0.0
    %313 = vmatpush1.msra.mxu0 0.0
    %314 = vmatprep.subr.mxu0 0.0
    %315 = vmatpush1.msra.mxu0 0.0
    %316 = vmatprep.subr.mxu0 0.0
    %317 = vmatpush1.msra.mxu0 0.0
    %318 = vmatprep.subr.mxu0 0.0
    %319 = vmatpush1.msra.mxu0 0.0
    %320 = vmatprep.subr.mxu0 0.0
    %321 = vmatpush1.msra.mxu0 0.0
    %322 = vmatprep.subr.mxu0 0.0
    %323 = vmatpush1.msra.mxu0 0.0
    %324 = vmatprep.subr.mxu0 0.0
    %325 = vmatpush1.msra.mxu0 0.0
    %326 = vmatprep.subr.mxu0 0.0
    %327 = vmatpush1.msra.mxu0 0.0
    %328 = vmatprep.subr.mxu0 0.0
    %329 = vmatpush1.msra.mxu0 0.0
    %330 = vmatprep.subr.mxu0 0.0
    %331 = vmatpush1.msra.mxu0 0.0
    %332 = vmatprep.subr.mxu0 0.0
    %333 = vmatpush1.msra.mxu0 0.0
    %334 = vmatprep.subr.mxu0 0.0
    %335 = vmatpush1.msra.mxu0 0.0
    %336 = vmatprep.subr.mxu0 0.0
    %337 = vmatpush1.msra.mxu0 0.0
    %338 = vmatprep.subr.mxu0 0.0
    %339 = vmatpush1.msra.mxu0 0.0
    %340 = vmatprep.subr.mxu0 0.0
    %341 = vmatpush1.msra.mxu0 0.0
    %342 = vmatprep.subr.mxu0 0.0
    %343 = vmatpush1.msra.mxu0 0.0
    %344 = vmatprep.subr.mxu0 0.0
    %345 = vmatpush1.msra.mxu0 0.0
    %346 = vmatprep.subr.mxu0 0.0
    %347 = vmatpush1.msra.mxu0 0.0
    %348 = vmatprep.subr.mxu0 0.0
    %349 = vmatpush1.msra.mxu0 0.0
    %350 = vmatprep.mubr.f32.mxu0 0.0
    %351 = vmatmul.mubr.f32.gmra.mrb[0].mxu0 %v284
    %v352 = vpop.f32.mrb[0].mxu0
    %v353 = vadd.f32 %v280, %v352
    %v354 = vpop.f32.mrb[0].mxu0
    %355 = vdwg.mxu0
    %v356 = vtanh.pop %v353
    %v357 = vld [vmem:[#allocation10] sm:$0xff]
    %v358 = vld [vmem:[#allocation10 + $0x8] sm:$0xff]
    %v359 = vld [vmem:[#allocation10 + $0x10] sm:$0xff]
    %v360 = vld [vmem:[#allocation10 + $0x18] sm:$0xff]
    %v361 = vld [vmem:[#allocation10 + $0x20] sm:$0xff]
    %v362 = vld [vmem:[#allocation10 + $0x28] sm:$0xff]
    %v363 = vld [vmem:[#allocation10 + $0x30] sm:$0xff]
    %v364 = vld [vmem:[#allocation10 + $0x38] sm:$0xff]
    %v365 = vld [vmem:[#allocation10 + $0x40] sm:$0xff]
    %v366 = vld [vmem:[#allocation10 + $0x48] sm:$0xff]
    %v367 = vld [vmem:[#allocation10 + $0x50] sm:$0xff]
    %v368 = vld [vmem:[#allocation10 + $0x58] sm:$0xff]
    %v369 = vld [vmem:[#allocation10 + $0x60] sm:$0xff]
    %v370 = vld [vmem:[#allocation10 + $0x68] sm:$0xff]
    %v371 = vld [vmem:[#allocation10 + $0x70] sm:$0xff]
    %v372 = vld [vmem:[#allocation10 + $0x78] sm:$0xff]
    %v373 = vld [vmem:[#allocation10 + $0x80] sm:$0xff]
    %v374 = vld [vmem:[#allocation10 + $0x88] sm:$0xff]
    %v375 = vld [vmem:[#allocation10 + $0x90] sm:$0xff]
    %v376 = vld [vmem:[#allocation10 + $0x98] sm:$0xff]
    %v377 = vld [vmem:[#allocation10 + $0xa0] sm:$0xff]
    %v378 = vld [vmem:[#allocation10 + $0xa8] sm:$0xff]
    %v379 = vld [vmem:[#allocation10 + $0xb0] sm:$0xff]
    %v380 = vld [vmem:[#allocation10 + $0xb8] sm:$0xff]
    %v381 = vld [vmem:[#allocation10 + $0xc0] sm:$0xff]
    %v382 = vld [vmem:[#allocation10 + $0xc8] sm:$0xff]
    %v383 = vld [vmem:[#allocation10 + $0xd0] sm:$0xff]
    %v384 = vld [vmem:[#allocation10 + $0xd8] sm:$0xff]
    %v385 = vld [vmem:[#allocation10 + $0xe0] sm:$0xff]
    %v386 = vld [vmem:[#allocation10 + $0xe8] sm:$0xff]
    %v387 = vld [vmem:[#allocation10 + $0xf0] sm:$0xff]
    %v388 = vld [vmem:[#allocation10 + $0xf8] sm:$0xff]
    %v389 = vld [vmem:[#allocation10 + $0x100] sm:$0xff]
    %v390 = vld [vmem:[#allocation10 + $0x108] sm:$0xff]
    %v391 = vld [vmem:[#allocation10 + $0x110] sm:$0xff]
    %v392 = vld [vmem:[#allocation10 + $0x118] sm:$0xff]
    %v393 = vld [vmem:[#allocation10 + $0x120] sm:$0xff]
    %v394 = vld [vmem:[#allocation10 + $0x128] sm:$0xff]
    %v395 = vld [vmem:[#allocation10 + $0x130] sm:$0xff]
    %v396 = vld [vmem:[#allocation10 + $0x138] sm:$0xff]
    %v397 = vld [vmem:[#allocation10 + $0x140] sm:$0xff]
    %v398 = vld [vmem:[#allocation10 + $0x148] sm:$0xff]
    %v399 = vld [vmem:[#allocation10 + $0x150] sm:$0xff]
    %v400 = vld [vmem:[#allocation10 + $0x158] sm:$0xff]
    %v401 = vld [vmem:[#allocation10 + $0x160] sm:$0xff]
    %v402 = vld [vmem:[#allocation10 + $0x168] sm:$0xff]
    %v403 = vld [vmem:[#allocation10 + $0x170] sm:$0xff]
    %v404 = vld [vmem:[#allocation10 + $0x178] sm:$0xff]
    %v405 = vld [vmem:[%s8] sm:$0x7]
    %v407 = vlaneseq
    %v408 = vshrl.u32 %v407, 7
    %v409 = vsub.s32 0, %v408
    %v410 = vrot.slane %v405, %v409
    %v411 = vlaneseq
    %v412 = vshrl.u32 %v411, 7
    %v413 = vsub.s32 1, %v412
    %v414 = vrot.slane %v405, %v413
    %v415 = vlaneseq
    %v416 = vshrl.u32 %v415, 7
    %v417 = vsub.s32 2, %v416
    %v418 = vrot.slane %v405, %v417
    %422 = vmatprep.subr.mxu0 %v358
    %423 = vmatpush1.msra.mxu0 %v357
    %424 = vmatprep.subr.mxu0 %v361
    %425 = vmatpush1.msra.mxu0 %v360
    %426 = vmatprep.subr.mxu0 %v364
    %427 = vmatpush1.msra.mxu0 %v363
    %428 = vmatprep.subr.mxu0 %v367
    %429 = vmatpush1.msra.mxu0 %v366
    %430 = vmatprep.subr.mxu0 %v370
    %431 = vmatpush1.msra.mxu0 %v369
    %432 = vmatprep.subr.mxu0 %v373
    %433 = vmatpush1.msra.mxu0 %v372
    %434 = vmatprep.subr.mxu0 %v376
    %435 = vmatpush1.msra.mxu0 %v375
    %436 = vmatprep.subr.mxu0 %v379
    %437 = vmatpush1.msra.mxu0 %v378
    %438 = vmatprep.subr.mxu0 %v382
    %439 = vmatpush1.msra.mxu0 %v381
    %440 = vmatprep.subr.mxu0 %v385
    %441 = vmatpush1.msra.mxu0 %v384
    %442 = vmatprep.subr.mxu0 %v388
    %443 = vmatpush1.msra.mxu0 %v387
    %444 = vmatprep.subr.mxu0 %v391
    %445 = vmatpush1.msra.mxu0 %v390
    %446 = vmatprep.subr.mxu0 %v394
    %447 = vmatpush1.msra.mxu0 %v393
    %448 = vmatprep.subr.mxu0 %v397
    %449 = vmatpush1.msra.mxu0 %v396
    %450 = vmatprep.subr.mxu0 %v400
    %451 = vmatpush1.msra.mxu0 %v399
    %452 = vmatprep.subr.mxu0 %v403
    %453 = vmatpush1.msra.mxu0 %v402
    %454 = vmatprep.subr.mxu0 0.0
    %455 = vmatpush1.msra.mxu0 0.0
    %456 = vmatprep.subr.mxu0 0.0
    %457 = vmatpush1.msra.mxu0 0.0
    %458 = vmatprep.subr.mxu0 0.0
    %459 = vmatpush1.msra.mxu0 0.0
    %460 = vmatprep.subr.mxu0 0.0
    %461 = vmatpush1.msra.mxu0 0.0
    %462 = vmatprep.subr.mxu0 0.0
    %463 = vmatpush1.msra.mxu0 0.0
    %464 = vmatprep.subr.mxu0 0.0
    %465 = vmatpush1.msra.mxu0 0.0
    %466 = vmatprep.subr.mxu0 0.0
    %467 = vmatpush1.msra.mxu0 0.0
    %468 = vmatprep.subr.mxu0 0.0
    %469 = vmatpush1.msra.mxu0 0.0
    %470 = vmatprep.subr.mxu0 0.0
    %471 = vmatpush1.msra.mxu0 0.0
    %472 = vmatprep.subr.mxu0 0.0
    %473 = vmatpush1.msra.mxu0 0.0
    %474 = vmatprep.subr.mxu0 0.0
    %475 = vmatpush1.msra.mxu0 0.0
    %476 = vmatprep.subr.mxu0 0.0
    %477 = vmatpush1.msra.mxu0 0.0
    %478 = vmatprep.subr.mxu0 0.0
    %479 = vmatpush1.msra.mxu0 0.0
    %480 = vmatprep.subr.mxu0 0.0
    %481 = vmatpush1.msra.mxu0 0.0
    %482 = vmatprep.subr.mxu0 0.0
    %483 = vmatpush1.msra.mxu0 0.0
    %484 = vmatprep.subr.mxu0 0.0
    %485 = vmatpush1.msra.mxu0 0.0
    %486 = vmatprep.mubr.f32.mxu0 0.0
    %487 = vmatmul.mubr.f32.gmra.mrb[0].mxu0 %v356
    %v488 = vpop.f32.mrb[0].mxu0
    %v489 = vadd.f32 %v410, %v488
    %v490 = vpop.f32.mrb[0].mxu0
    %v491 = vadd.f32 %v414, %v490
    %492 = vdwg.mxu0
    %493 = vmatprep.subr.mxu0 0.0
    %494 = vmatpush1.msra.mxu0 %v359
    %495 = vmatprep.subr.mxu0 0.0
    %496 = vmatpush1.msra.mxu0 %v362
    %497 = vmatprep.subr.mxu0 0.0
    %498 = vmatpush1.msra.mxu0 %v365
    %499 = vmatprep.subr.mxu0 0.0
    %500 = vmatpush1.msra.mxu0 %v368
    %501 = vmatprep.subr.mxu0 0.0
    %502 = vmatpush1.msra.mxu0 %v371
    %503 = vmatprep.subr.mxu0 0.0
    %504 = vmatpush1.msra.mxu0 %v374
    %505 = vmatprep.subr.mxu0 0.0
    %506 = vmatpush1.msra.mxu0 %v377
    %507 = vmatprep.subr.mxu0 0.0
    %508 = vmatpush1.msra.mxu0 %v380
    %509 = vmatprep.subr.mxu0 0.0
    %510 = vmatpush1.msra.mxu0 %v383
    %511 = vmatprep.subr.mxu0 0.0
    %512 = vmatpush1.msra.mxu0 %v386
    %513 = vmatprep.subr.mxu0 0.0
    %514 = vmatpush1.msra.mxu0 %v389
    %515 = vmatprep.subr.mxu0 0.0
    %516 = vmatpush1.msra.mxu0 %v392
    %517 = vmatprep.subr.mxu0 0.0
    %518 = vmatpush1.msra.mxu0 %v395
    %519 = vmatprep.subr.mxu0 0.0
    %520 = vmatpush1.msra.mxu0 %v398
    %521 = vmatprep.subr.mxu0 0.0
    %522 = vmatpush1.msra.mxu0 %v401
    %523 = vmatprep.subr.mxu0 0.0
    %524 = vmatpush1.msra.mxu0 %v404
    %525 = vmatprep.subr.mxu0 0.0
    %526 = vmatpush1.msra.mxu0 0.0
    %527 = vmatprep.subr.mxu0 0.0
    %528 = vmatpush1.msra.mxu0 0.0
    %529 = vmatprep.subr.mxu0 0.0
    %530 = vmatpush1.msra.mxu0 0.0
    %531 = vmatprep.subr.mxu0 0.0
    %532 = vmatpush1.msra.mxu0 0.0
    %533 = vmatprep.subr.mxu0 0.0
    %534 = vmatpush1.msra.mxu0 0.0
    %535 = vmatprep.subr.mxu0 0.0
    %536 = vmatpush1.msra.mxu0 0.0
    %537 = vmatprep.subr.mxu0 0.0
    %538 = vmatpush1.msra.mxu0 0.0
    %539 = vmatprep.subr.mxu0 0.0
    %540 = vmatpush1.msra.mxu0 0.0
    %541 = vmatprep.subr.mxu0 0.0
    %542 = vmatpush1.msra.mxu0 0.0
    %543 = vmatprep.subr.mxu0 0.0
    %544 = vmatpush1.msra.mxu0 0.0
    %545 = vmatprep.subr.mxu0 0.0
    %546 = vmatpush1.msra.mxu0 0.0
    %547 = vmatprep.subr.mxu0 0.0
    %548 = vmatpush1.msra.mxu0 0.0
    %549 = vmatprep.subr.mxu0 0.0
    %550 = vmatpush1.msra.mxu0 0.0
    %551 = vmatprep.subr.mxu0 0.0
    %552 = vmatpush1.msra.mxu0 0.0
    %553 = vmatprep.subr.mxu0 0.0
    %554 = vmatpush1.msra.mxu0 0.0
    %555 = vmatprep.subr.mxu0 0.0
    %556 = vmatpush1.msra.mxu0 0.0
    %557 = vmatprep.mubr.f32.mxu0 0.0
    %558 = vmatmul.mubr.f32.gmra.mrb[0].mxu0 %v356
    %v559 = vpop.f32.mrb[0].mxu0
    %v560 = vadd.f32 %v418, %v559
    %v561 = vpop.f32.mrb[0].mxu0
    %562 = vdwg.mxu0
    %563 = vst [vmem:[#allocation11] sm:$0xff] %v489
    %564 = vst [vmem:[#allocation11 + $0x8] sm:$0xff] %v491
    %565 = vst [vmem:[#allocation11 + $0x10] sm:$0xff] %v560
    // Predicated region
    $region58: #{tpu_custom_call.1} parent=1 // pred_check
      _
    $region59: #{tpu_custom_call.1} parent=1 // pred_check_branch
      %567 = sbr.rel (0) target = $region61
    $region60: #{tpu_custom_call.1} parent=1 // pred_region
      %s569 = ssub.s32 384, 384
      %570 = vsyncadd [#allocation4], %s569
      %s572 = sshll.u32 [#allocation11], 4
      %s573 = int_to_ptr.vmem [resolvable:$true] %s572
      %575 = dma.vmem_to_hbm [thread:$0]  %s573, 384, %s9, [#allocation4]
    $region61: #{tpu_custom_call.1} parent=1 // pred_fallthru
      _
    // Predicated region
    $region62: #{tpu_custom_call.1} parent=1 // pred_check
      _
    $region63: #{tpu_custom_call.1} parent=1 // pred_check_branch
      %577 = sbr.rel (0) target = $region65
    $region64: #{tpu_custom_call.1} parent=1 // pred_region
      %578 = dma.done [#allocation4], 384
    $region65: #{tpu_custom_call.1} parent=1 // pred_fallthru
      _
    %579 = vsyncpa [#allocation3], 1
    %580 = vsyncpa [#allocation6], 1
    %581 = vsyncpa [#allocation9], 1
    %582 = vsyncpa [#allocation4], 1

</llo_original>
